<compile_context>
chip_gen: v7x
topology: tpu7x:2x2x1
jax: 0.10.0
libtpu: 0.0.40
codegen_flags: <defaults>
</compile_context>

<pallas_src>
import functools

import jax
import jax.numpy as jnp
from jax.experimental import pallas as pl
from jax.experimental.pallas import tpu as pltpu


def _round_up(x, m):
    return ((x + m - 1) // m) * m


# ----------------------------- Pallas kernel ------------------------------ #
def _critic_kernel(obs_ref, act_ref, w1_ref, b1_ref, w2_ref, b2_ref,
                   wh_ref, bh_ref, out_ref, x_ref):
    """Fused 3-layer MLP.

    [obs | action] is materialised into a lane-padded VMEM scratch (K padded to a
    multiple of 128) so layer 1 is one dense MXU push; both output heads are fused
    and lane-padded to 128 so the output store is lane-dense.
    """
    obs_dim = obs_ref.shape[-1]
    act_dim = act_ref.shape[-1]
    in_dim = obs_dim + act_dim
    in_pad = x_ref.shape[-1]
    rows = x_ref.shape[0]

    # Zero the padding lanes every step (self-contained per step: the 'parallel'
    # grid axis may be sharded across TensorCores, so no program_id-gated init).
    if in_pad > in_dim:
        x_ref[:, in_dim:] = jnp.zeros((rows, in_pad - in_dim), x_ref.dtype)
    x_ref[:, :obs_dim] = obs_ref[...].astype(x_ref.dtype)
    x_ref[:, obs_dim:in_dim] = act_ref[...].astype(x_ref.dtype)

    h = jnp.dot(x_ref[...], w1_ref[...], preferred_element_type=jnp.float32)
    h = jnp.maximum(h + b1_ref[...], 0.0)                                   # relu (f32)
    h = jnp.dot(h.astype(w2_ref.dtype), w2_ref[...],
                preferred_element_type=jnp.float32)
    h = jnp.maximum(h + b2_ref[...], 0.0)                                   # relu (f32)
    out_ref[...] = (jnp.dot(h.astype(wh_ref.dtype), wh_ref[...],
                            preferred_element_type=jnp.float32)
                    + bh_ref[...]).astype(out_ref.dtype)


# --------------------------- tiling / VMEM budget --------------------------- #
def _vmem_limit_bytes():
    """Scoped-VMEM limit: 3/4 of physical VMEM, capped at 96 MiB (generation-aware)."""
    phys = 64 << 20                                   # conservative fallback (v7x per-TC)
    try:
        phys = int(pltpu.get_tpu_info().vmem_capacity_bytes)
    except Exception:
        pass
    return int(min(phys * 3 // 4, 96 << 20))


def _max_batch_tile(obs_dim, act_dim, in_pad, hidden, head_pad, mm_bytes, vmem_limit):
    """Largest batch tile (multiple of 8) fitting the VMEM budget."""
    # Single-buffered resident weights + f32 biases.
    weight_bytes = mm_bytes * (in_pad * hidden + hidden * hidden + hidden * head_pad)
    weight_bytes += 4 * (2 * hidden + head_pad)
    # Per-row streaming cost: double-buffered obs/act inputs, double-buffered f32
    # output tile, the concat scratch, ~3 f32 hidden-sized temporaries.
    per_row = (2 * 4 * (obs_dim + act_dim) + 2 * 4 * head_pad
               + mm_bytes * in_pad + 3 * 4 * hidden)
    budget = vmem_limit - weight_bytes - (4 << 20)    # slack for compiler temporaries
    cap = budget // per_row if per_row > 0 else 8
    hard_cap = 4096 if mm_bytes == 2 else 2048        # v7x-safe caps (bf16 / f32)
    cap = max(8, min(int(cap), hard_cap))
    return (cap // 8) * 8


def _batch_tiling(batch, max_tile):
    """Pick (tile, padded_batch): tile is a multiple of 8; padded_batch of tile."""
    bp8 = _round_up(batch, 8)                         # avoid sub-sublane masked rows
    if bp8 > max_tile:
        tb = max_tile
    elif bp8 >= 1024:
        # Big enough to split into >=2 'parallel' steps -> both v7x TCs get work.
        tb = _round_up(-(-bp8 // 2), 8)
    else:
        tb = bp8
    return tb, _round_up(bp8, tb)


def _resident_spec(shape):
    """Grid-invariant operand: stays in VMEM, single-buffered."""
    idx = lambda i: (0, 0)
    if hasattr(pl, "Buffered"):
        try:
            return pl.BlockSpec(shape, idx, pipeline_mode=pl.Buffered(1))
        except TypeError:
            pass
    return pl.BlockSpec(shape, idx)


# ------------------------------- wrapper ----------------------------------- #
@functools.partial(jax.jit, static_argnames=("model", "use_bf16"))
def critic_forward(obs, action, params, model=True, use_bf16=False):
    B, obs_dim = obs.shape
    act_dim = action.shape[1]
    hidden = params["w2"].shape[0]
    out_dim = params["bhead"].shape[1] // 2
    in_dim = obs_dim + act_dim
    in_pad = _round_up(in_dim, 128)                   # K-padded layer-1 operand

    mm_dtype = jnp.bfloat16 if use_bf16 else jnp.float32
    mm_bytes = 2 if use_bf16 else 4

    # model=False: drop the reward head entirely (static slice of the fused head).
    if model:
        wh, bh = params["whead"], params["bhead"]
    else:
        wh, bh = params["whead"][:, :out_dim], params["bhead"][:, :out_dim]
    head_dim = wh.shape[1]
    head_pad = _round_up(head_dim, 128)               # lane-dense output store

    # Tiny wrapper-side weight prep (K-pad W1, lane-pad the fused head, dtype cast).
    w1 = jnp.concatenate([params["w1_obs"], params["w1_act"]], axis=0)
    w1_p = jnp.pad(w1, ((0, in_pad - in_dim), (0, 0))).astype(mm_dtype)
    w2_p = params["w2"].astype(mm_dtype)
    wh_p = jnp.pad(wh, ((0, 0), (0, head_pad - head_dim))).astype(mm_dtype)
    bh_p = jnp.pad(bh, ((0, 0), (0, head_pad - head_dim)))
    b1, b2 = params["b1"], params["b2"]

    vmem_limit = _vmem_limit_bytes()
    max_tile = _max_batch_tile(obs_dim, act_dim, in_pad, hidden, head_pad,
                               mm_bytes, vmem_limit)
    tb, bp = _batch_tiling(B, max_tile)
    obs_p, act_p = obs, action
    if bp > B:
        obs_p = jnp.pad(obs, ((0, bp - B), (0, 0)))
        act_p = jnp.pad(action, ((0, bp - B), (0, 0)))

    flops = 2 * bp * (in_pad * hidden + hidden * hidden + hidden * head_pad)
    bytes_accessed = (4 * bp * (obs_dim + act_dim + head_pad)
                      + mm_bytes * (in_pad * hidden + hidden * hidden + hidden * head_pad)
                      + 4 * (2 * hidden + head_pad))

    out = pl.pallas_call(
        _critic_kernel,
        out_shape=jax.ShapeDtypeStruct((bp, head_pad), jnp.float32),
        grid=(bp // tb,),
        in_specs=[
            pl.BlockSpec((tb, obs_dim), lambda i: (i, 0)),
            pl.BlockSpec((tb, act_dim), lambda i: (i, 0)),
            _resident_spec((in_pad, hidden)),
            _resident_spec((1, hidden)),
            _resident_spec((hidden, hidden)),
            _resident_spec((1, hidden)),
            _resident_spec((hidden, head_pad)),
            _resident_spec((1, head_pad)),
        ],
        out_specs=pl.BlockSpec((tb, head_pad), lambda i: (i, 0)),
        scratch_shapes=[pltpu.VMEM((tb, in_pad), mm_dtype)],
        compiler_params=pltpu.CompilerParams(
            dimension_semantics=("parallel",),
            vmem_limit_bytes=int(vmem_limit)),
        cost_estimate=pl.CostEstimate(
            flops=flops, transcendentals=0, bytes_accessed=bytes_accessed),
    )(obs_p, act_p, w1_p, b1, w2_p, b2, wh_p, bh_p)

    if model:
        return [out[:B, :out_dim], out[:B, out_dim:2 * out_dim]]   # value, reward
    return [out[:B, :out_dim]]                                     # value only


# ------------------------- deterministic parameters ------------------------ #
def init_params(key, obs_dim, act_dim, hidden, out_dim):
    """Mimics torch nn.Linear default init: U(-1/sqrt(fan_in), 1/sqrt(fan_in)).
    Weights stored (in, out); W1 pre-split along its input dim (obs / action rows);
    the two heads pre-fused along the output dim."""
    def linear(k, fan_in, fan_out):
        kw, kb = jax.random.split(k)
        bound = 1.0 / jnp.sqrt(fan_in)
        w = jax.random.uniform(kw, (fan_in, fan_out), jnp.float32, -bound, bound)
        b = jax.random.uniform(kb, (1, fan_out), jnp.float32, -bound, bound)
        return w, b

    input_dim = obs_dim + act_dim
    k1, k2, k3, k4 = jax.random.split(key, 4)
    w1, b1 = linear(k1, input_dim, hidden)
    w2, b2 = linear(k2, hidden, hidden)
    wv, bv = linear(k3, hidden, out_dim)
    wr, br = linear(k4, hidden, out_dim)
    return dict(
        w1_obs=w1[:obs_dim], w1_act=w1[obs_dim:], b1=b1,
        w2=w2, b2=b2,
        whead=jnp.concatenate([wv, wr], axis=1),
        bhead=jnp.concatenate([bv, br], axis=1),
    )


# ------------------------------ reference ---------------------------------- #
def critic_reference(obs, action, params, model=True):
    """Pure-JAX reference following the original module math exactly."""
    out_dim = params["bhead"].shape[1] // 2
    w1 = jnp.concatenate([params["w1_obs"], params["w1_act"]], axis=0)
    wv, wr = params["whead"][:, :out_dim], params["whead"][:, out_dim:]
    bv, br = params["bhead"][:, :out_dim], params["bhead"][:, out_dim:]
    x = jnp.concatenate([obs, action], axis=-1)
    h = jnp.maximum(x @ w1 + params["b1"], 0.0)
    h = jnp.maximum(h @ params["w2"] + params["b2"], 0.0)
    out = [h @ wv + bv]
    if model:
        out.append(h @ wr + br)
    return out


if __name__ == "__main__":
    # Small shapes consistent with the module: input_dim = obs_dim + act_dim.
    B, OBS_DIM, ACT_DIM, HIDDEN, OUT_DIM = 8, 24, 8, 32, 4

    key = jax.random.PRNGKey(0)
    k_obs, k_act, k_par = jax.random.split(key, 3)
    obs = jax.random.normal(k_obs, (B, OBS_DIM), jnp.float32)
    action = jax.random.normal(k_act, (B, ACT_DIM), jnp.float32)
    params = init_params(k_par, OBS_DIM, ACT_DIM, HIDDEN, OUT_DIM)

    # model=True: value + reward heads (f32 path, tight tolerance).
    outs = critic_forward(obs, action, params, model=True)
    outs = [jax.block_until_ready(o) for o in outs]
    refs = critic_reference(obs, action, params, model=True)
    assert len(outs) == 2
    for o, r in zip(outs, refs):
        assert o.shape == (B, OUT_DIM)
        assert jnp.allclose(o, r, atol=1e-4, rtol=1e-4)

    # model=False: value head only (reward head skipped entirely in the kernel).
    outs_v = critic_forward(obs, action, params, model=False)
    outs_v = [jax.block_until_ready(o) for o in outs_v]
    refs_v = critic_reference(obs, action, params, model=False)
    assert len(outs_v) == 1
    assert outs_v[0].shape == (B, OUT_DIM)
    assert jnp.allclose(outs_v[0], refs_v[0], atol=1e-4, rtol=1e-4)

    # Batch not a multiple of 8: exercises the sublane-rounded padding + slice-off path.
    B2 = 10
    obs2 = jax.random.normal(jax.random.PRNGKey(1), (B2, OBS_DIM), jnp.float32)
    act2 = jax.random.normal(jax.random.PRNGKey(2), (B2, ACT_DIM), jnp.float32)
    outs2 = [jax.block_until_ready(o) for o in critic_forward(obs2, act2, params, model=True)]
    refs2 = critic_reference(obs2, act2, params, model=True)
    for o, r in zip(outs2, refs2):
        assert o.shape == (B2, OUT_DIM)
        assert jnp.allclose(o, r, atol=1e-4, rtol=1e-4)

    # bf16 matmul-operand path (v6e/v7x lever): loose tolerance vs. the f32 reference.
    outs_bf = [jax.block_until_ready(o)
               for o in critic_forward(obs, action, params, model=True, use_bf16=True)]
    for o, r in zip(outs_bf, refs):
        assert o.shape == (B, OUT_DIM)
        assert jnp.allclose(o, r, atol=1e-1, rtol=1e-1)

    print("KERNEL_OK")
</pallas_src>

<mosaic_0001>
module attributes {stable_mosaic.version = 11 : i64} {
  func.func @_critic_kernel(%arg0: i32, %arg1: memref<8x24xf32, #tpu.memory_space<vmem>>, %arg2: memref<8x8xf32, #tpu.memory_space<vmem>>, %arg3: memref<128x32xf32, #tpu.memory_space<vmem>>, %arg4: memref<1x32xf32, #tpu.memory_space<vmem>>, %arg5: memref<32x32xf32, #tpu.memory_space<vmem>>, %arg6: memref<1x32xf32, #tpu.memory_space<vmem>>, %arg7: memref<32x128xf32, #tpu.memory_space<vmem>>, %arg8: memref<1x128xf32, #tpu.memory_space<vmem>>, %arg9: memref<8x128xf32, #tpu.memory_space<vmem>>, %arg10: memref<8x128xf32, #tpu.memory_space<vmem>>) attributes {dimension_semantics = [#tpu.dimension_semantics<parallel>], iteration_bounds = array<i64: 1>, scalar_prefetch = 0 : i64, scratch_operands = 1 : i64, tpu.core_type = #tpu.core_type<tc>, window_params = [{transform_indices = @transform_0, window_bounds = array<i64: 8, 24>}, {transform_indices = @transform_1, window_bounds = array<i64: 8, 8>}, {pipeline_mode = #tpu.pipeline_mode<synchronous>, transform_indices = @transform_2, window_bounds = array<i64: 128, 32>}, {pipeline_mode = #tpu.pipeline_mode<synchronous>, transform_indices = @transform_3, window_bounds = array<i64: 1, 32>}, {pipeline_mode = #tpu.pipeline_mode<synchronous>, transform_indices = @transform_4, window_bounds = array<i64: 32, 32>}, {pipeline_mode = #tpu.pipeline_mode<synchronous>, transform_indices = @transform_5, window_bounds = array<i64: 1, 32>}, {pipeline_mode = #tpu.pipeline_mode<synchronous>, transform_indices = @transform_6, window_bounds = array<i64: 32, 128>}, {pipeline_mode = #tpu.pipeline_mode<synchronous>, transform_indices = @transform_7, window_bounds = array<i64: 1, 128>}, {transform_indices = @transform_8, window_bounds = array<i64: 8, 128>}]} {
    %cst = arith.constant 0.000000e+00 : f32
    %0 = vector.broadcast %cst : f32 to vector<8x96xf32>
    %c0 = arith.constant 0 : index
    %c32 = arith.constant 32 : index
    %1 = vector.load %arg10[%c0, %c32] : memref<8x128xf32, #tpu.memory_space<vmem>>, vector<8x96xf32>
    tpu.vector_store %arg10[%c0, %c32], %0 {strides = array<i32>} : memref<8x128xf32, #tpu.memory_space<vmem>>, vector<8x96xf32>,
    %c0_0 = arith.constant 0 : index
    %c0_1 = arith.constant 0 : index
    %2 = vector.load %arg1[%c0_0, %c0_1] : memref<8x24xf32, #tpu.memory_space<vmem>>, vector<8x24xf32>
    %c0_2 = arith.constant 0 : index
    %c0_3 = arith.constant 0 : index
    %3 = vector.load %arg10[%c0_2, %c0_3] : memref<8x128xf32, #tpu.memory_space<vmem>>, vector<8x24xf32>
    tpu.vector_store %arg10[%c0_2, %c0_3], %2 {strides = array<i32>} : memref<8x128xf32, #tpu.memory_space<vmem>>, vector<8x24xf32>,
    %c0_4 = arith.constant 0 : index
    %c0_5 = arith.constant 0 : index
    %4 = vector.load %arg2[%c0_4, %c0_5] : memref<8x8xf32, #tpu.memory_space<vmem>>, vector<8x8xf32>
    %c0_6 = arith.constant 0 : index
    %c24 = arith.constant 24 : index
    %5 = vector.load %arg10[%c0_6, %c24] : memref<8x128xf32, #tpu.memory_space<vmem>>, vector<8x8xf32>
    tpu.vector_store %arg10[%c0_6, %c24], %4 {strides = array<i32>} : memref<8x128xf32, #tpu.memory_space<vmem>>, vector<8x8xf32>,
    %c0_7 = arith.constant 0 : index
    %c0_8 = arith.constant 0 : index
    %6 = vector.load %arg10[%c0_7, %c0_8] : memref<8x128xf32, #tpu.memory_space<vmem>>, vector<8x128xf32>
    %c0_9 = arith.constant 0 : index
    %c0_10 = arith.constant 0 : index
    %7 = vector.load %arg3[%c0_9, %c0_10] : memref<128x32xf32, #tpu.memory_space<vmem>>, vector<128x32xf32>
    %cst_11 = arith.constant dense<0.000000e+00> : vector<8x32xf32>
    %8 = tpu.matmul %6, %7, %cst_11 {dimension_numbers = #tpu.dot_dimension_numbers<[1], [0], [0], [1], [0, 0, 1, 1], [], []>} : vector<8x128xf32>, vector<128x32xf32>, vector<8x32xf32> -> vector<8x32xf32>
    %c0_12 = arith.constant 0 : index
    %c0_13 = arith.constant 0 : index
    %9 = vector.load %arg4[%c0_12, %c0_13] : memref<1x32xf32, #tpu.memory_space<vmem>>, vector<1x32xf32>
    %10 = vector.broadcast %9 : vector<1x32xf32> to vector<8x32xf32>
    %11 = arith.addf %8, %10 : vector<8x32xf32>
    %cst_14 = arith.constant 0.000000e+00 : f32
    %12 = vector.broadcast %cst_14 : f32 to vector<8x32xf32>
    %13 = arith.maximumf %11, %12 : vector<8x32xf32>
    %c0_15 = arith.constant 0 : index
    %c0_16 = arith.constant 0 : index
    %14 = vector.load %arg5[%c0_15, %c0_16] : memref<32x32xf32, #tpu.memory_space<vmem>>, vector<32x32xf32>
    %cst_17 = arith.constant dense<0.000000e+00> : vector<8x32xf32>
    %15 = tpu.matmul %13, %14, %cst_17 {dimension_numbers = #tpu.dot_dimension_numbers<[1], [0], [0], [1], [0, 0, 1, 1], [], []>} : vector<8x32xf32>, vector<32x32xf32>, vector<8x32xf32> -> vector<8x32xf32>
    %c0_18 = arith.constant 0 : index
    %c0_19 = arith.constant 0 : index
    %16 = vector.load %arg6[%c0_18, %c0_19] : memref<1x32xf32, #tpu.memory_space<vmem>>, vector<1x32xf32>
    %17 = vector.broadcast %16 : vector<1x32xf32> to vector<8x32xf32>
    %18 = arith.addf %15, %17 : vector<8x32xf32>
    %cst_20 = arith.constant 0.000000e+00 : f32
    %19 = vector.broadcast %cst_20 : f32 to vector<8x32xf32>
    %20 = arith.maximumf %18, %19 : vector<8x32xf32>
    %c0_21 = arith.constant 0 : index
    %c0_22 = arith.constant 0 : index
    %21 = vector.load %arg7[%c0_21, %c0_22] : memref<32x128xf32, #tpu.memory_space<vmem>>, vector<32x128xf32>
    %cst_23 = arith.constant dense<0.000000e+00> : vector<8x128xf32>
    %22 = tpu.matmul %20, %21, %cst_23 {dimension_numbers = #tpu.dot_dimension_numbers<[1], [0], [0], [1], [0, 0, 1, 1], [], []>} : vector<8x32xf32>, vector<32x128xf32>, vector<8x128xf32> -> vector<8x128xf32>
    %c0_24 = arith.constant 0 : index
    %c0_25 = arith.constant 0 : index
    %23 = vector.load %arg8[%c0_24, %c0_25] : memref<1x128xf32, #tpu.memory_space<vmem>>, vector<1x128xf32>
    %24 = vector.broadcast %23 : vector<1x128xf32> to vector<8x128xf32>
    %25 = arith.addf %22, %24 : vector<8x128xf32>
    %c0_26 = arith.constant 0 : index
    %c0_27 = arith.constant 0 : index
    %26 = vector.load %arg9[%c0_26, %c0_27] : memref<8x128xf32, #tpu.memory_space<vmem>>, vector<8x128xf32>
    tpu.vector_store %arg9[%c0_26, %c0_27], %25 {strides = array<i32>} : memref<8x128xf32, #tpu.memory_space<vmem>>, vector<8x128xf32>,
    return
  }
  func.func @transform_0(%arg0: i32) -> (i32, i32) {
    %c0_i32 = arith.constant 0 : i32
    %c0_i32_0 = arith.constant 0 : i32
    return %arg0, %c0_i32 : i32, i32
  }
  func.func @transform_1(%arg0: i32) -> (i32, i32) {
    %c0_i32 = arith.constant 0 : i32
    %c0_i32_0 = arith.constant 0 : i32
    return %arg0, %c0_i32 : i32, i32
  }
  func.func @transform_2(%arg0: i32) -> (i32, i32) {
    %c0_i32 = arith.constant 0 : i32
    %c0_i32_0 = arith.constant 0 : i32
    %c0_i32_1 = arith.constant 0 : i32
    return %c0_i32, %c0_i32_0 : i32, i32
  }
  func.func @transform_3(%arg0: i32) -> (i32, i32) {
    %c0_i32 = arith.constant 0 : i32
    %c0_i32_0 = arith.constant 0 : i32
    %c0_i32_1 = arith.constant 0 : i32
    return %c0_i32, %c0_i32_0 : i32, i32
  }
  func.func @transform_4(%arg0: i32) -> (i32, i32) {
    %c0_i32 = arith.constant 0 : i32
    %c0_i32_0 = arith.constant 0 : i32
    %c0_i32_1 = arith.constant 0 : i32
    return %c0_i32, %c0_i32_0 : i32, i32
  }
  func.func @transform_5(%arg0: i32) -> (i32, i32) {
    %c0_i32 = arith.constant 0 : i32
    %c0_i32_0 = arith.constant 0 : i32
    %c0_i32_1 = arith.constant 0 : i32
    return %c0_i32, %c0_i32_0 : i32, i32
  }
  func.func @transform_6(%arg0: i32) -> (i32, i32) {
    %c0_i32 = arith.constant 0 : i32
    %c0_i32_0 = arith.constant 0 : i32
    %c0_i32_1 = arith.constant 0 : i32
    return %c0_i32, %c0_i32_0 : i32, i32
  }
  func.func @transform_7(%arg0: i32) -> (i32, i32) {
    %c0_i32 = arith.constant 0 : i32
    %c0_i32_0 = arith.constant 0 : i32
    %c0_i32_1 = arith.constant 0 : i32
    return %c0_i32, %c0_i32_0 : i32, i32
  }
  func.func @transform_8(%arg0: i32) -> (i32, i32) {
    %c0_i32 = arith.constant 0 : i32
    %c0_i32_0 = arith.constant 0 : i32
    return %arg0, %c0_i32 : i32, i32
  }
}

</mosaic_0001>

<llo_original>
// kernel: critic_forward.1
$region0: #{critic_forward.1}
  #allocation0 [shape = 'u32[]', space=smem, size = 0x4, offset = 0x4, fixed_abs, tag = 'smem constant byte address 0x4 - core index']
  #allocation1 [shape = 'u32[144,128]{1,0:T(1,128)}', space=vmem, size = 0x12000, scoped, tag = 'internal scratch']
  #allocation2 [shape = 'f32[8,128]{1,0:T(8,128)}', space=vmem, size = 0x1000, scoped, tag = 'scratch operand']
  %s0 = inlined_call_operand.vmem [shape: f32[8,24], index: 0, kind: input, shape index: {}]
  %s1 = inlined_call_operand.vmem [shape: f32[8,8], index: 1, kind: input, shape index: {}]
  %s2 = inlined_call_operand.vmem [shape: f32[128,32], index: 2, kind: input, shape index: {}]
  %s3 = inlined_call_operand.vmem [shape: f32[1,32], index: 3, kind: input, shape index: {}]
  %s4 = inlined_call_operand.vmem [shape: f32[32,32], index: 4, kind: input, shape index: {}]
  %s5 = inlined_call_operand.vmem [shape: f32[1,32], index: 5, kind: input, shape index: {}]
  %s6 = inlined_call_operand.vmem [shape: f32[32,128], index: 6, kind: input, shape index: {}]
  %s7 = inlined_call_operand.vmem [shape: f32[1,128], index: 7, kind: input, shape index: {}]
  %s8 = inlined_call_operand.vmem [shape: f32[8,128], index: 8, kind: output, shape index: {}]
  %s9 = sld [smem:[#allocation0]]
  $region42: #{critic_forward.1} parent=0
    _
  %s11 = ssub.s32 1, %s9
  %s12 = scalar_select 0, %s11, %s9
  // Predicated region
  $region2: #{critic_forward.1} parent=0 // pred_check
    _
  $region3: #{critic_forward.1} parent=0 // pred_check_branch
    %14 = sbr.rel (0) target = $region5
  $region4: #{critic_forward.1} parent=0 // pred_region
    _
  $region5: #{critic_forward.1} parent=0 // pred_fallthru
    _
  // Predicated region
  $region6: #{critic_forward.1} parent=0 // pred_check
    _
  $region7: #{critic_forward.1} parent=0 // pred_check_branch
    %16 = sbr.rel (0) target = $region9
  $region8: #{critic_forward.1} parent=0 // pred_region
    _
  $region9: #{critic_forward.1} parent=0 // pred_fallthru
    _
  // Predicated region
  $region10: #{critic_forward.1} parent=0 // pred_check
    _
  $region11: #{critic_forward.1} parent=0 // pred_check_branch
    %18 = sbr.rel (0) target = $region13
  $region12: #{critic_forward.1} parent=0 // pred_region
    _
  $region13: #{critic_forward.1} parent=0 // pred_fallthru
    _
  // Predicated region
  $region14: #{critic_forward.1} parent=0 // pred_check
    _
  $region15: #{critic_forward.1} parent=0 // pred_check_branch
    %20 = sbr.rel (0) target = $region17
  $region16: #{critic_forward.1} parent=0 // pred_region
    _
  $region17: #{critic_forward.1} parent=0 // pred_fallthru
    _
  // Predicated region
  $region18: #{critic_forward.1} parent=0 // pred_check
    _
  $region19: #{critic_forward.1} parent=0 // pred_check_branch
    %22 = sbr.rel (0) target = $region21
  $region20: #{critic_forward.1} parent=0 // pred_region
    _
  $region21: #{critic_forward.1} parent=0 // pred_fallthru
    _
  // Predicated region
  $region22: #{critic_forward.1} parent=0 // pred_check
    _
  $region23: #{critic_forward.1} parent=0 // pred_check_branch
    %24 = sbr.rel (0) target = $region25
  $region24: #{critic_forward.1} parent=0 // pred_region
    _
  $region25: #{critic_forward.1} parent=0 // pred_fallthru
    _
  // Predicated region
  $region26: #{critic_forward.1} parent=0 // pred_check
    _
  $region27: #{critic_forward.1} parent=0 // pred_check_branch
    %26 = sbr.rel (0) target = $region29
  $region28: #{critic_forward.1} parent=0 // pred_region
    _
  $region29: #{critic_forward.1} parent=0 // pred_fallthru
    _
  // Predicated region
  $region30: #{critic_forward.1} parent=0 // pred_check
    _
  $region31: #{critic_forward.1} parent=0 // pred_check_branch
    %28 = sbr.rel (0) target = $region33
  $region32: #{critic_forward.1} parent=0 // pred_region
    _
  $region33: #{critic_forward.1} parent=0 // pred_fallthru
    _
  %vm29 = vcmask 1047808
  %30 = vst.msk [vmem:[#allocation2] sm:$0xff] %vm29, 0.0
  %v31 = vld [vmem:[%s0] sm:$0xff]
  %vm32 = vcmask 195584
  %33 = vst.msk [vmem:[#allocation2] sm:$0xff] %vm32, %v31
  %v34 = vld [vmem:[%s1] sm:$0xff]
  %36 = vrot.lane.b32.xlu0 %v34, 24
  %v37 = vpop.permute.xlu0 %36
  %vm39 = vcmask 261312
  %40 = vst.msk [vmem:[#allocation2] sm:$0xff] %vm39, %v37
  %v41 = vld [vmem:[#allocation2] sm:$0xff]
  %v42 = vld [vmem:[%s2] sm:$0xff]
  %v43 = vld [vmem:[%s2 + $0x8] sm:$0xff]
  %v44 = vld [vmem:[%s2 + $0x10] sm:$0xff]
  %v45 = vld [vmem:[%s2 + $0x18] sm:$0xff]
  %v46 = vld [vmem:[%s2 + $0x20] sm:$0xff]
  %v47 = vld [vmem:[%s2 + $0x28] sm:$0xff]
  %v48 = vld [vmem:[%s2 + $0x30] sm:$0xff]
  %v49 = vld [vmem:[%s2 + $0x38] sm:$0xff]
  %v50 = vld [vmem:[%s2 + $0x40] sm:$0xff]
  %v51 = vld [vmem:[%s2 + $0x48] sm:$0xff]
  %v52 = vld [vmem:[%s2 + $0x50] sm:$0xff]
  %v53 = vld [vmem:[%s2 + $0x58] sm:$0xff]
  %v54 = vld [vmem:[%s2 + $0x60] sm:$0xff]
  %v55 = vld [vmem:[%s2 + $0x68] sm:$0xff]
  %v56 = vld [vmem:[%s2 + $0x70] sm:$0xff]
  %v57 = vld [vmem:[%s2 + $0x78] sm:$0xff]
  %v58 = vld [vmem:[%s3] sm:$0x1]
  %v60 = vlaneseq
  %v61 = vshrl.u32 %v60, 7
  %v62 = vsub.s32 0, %v61
  %v63 = vrot.slane %v58, %v62
  %65 = vmatprep.subr.mxu0 0.0
  %66 = vmatpush1.msra.mxu0 %v42
  %67 = vmatprep.subr.mxu0 0.0
  %68 = vmatpush1.msra.mxu0 %v43
  %69 = vmatprep.subr.mxu0 0.0
  %70 = vmatpush1.msra.mxu0 %v44
  %71 = vmatprep.subr.mxu0 0.0
  %72 = vmatpush1.msra.mxu0 %v45
  %73 = vmatprep.subr.mxu0 0.0
  %74 = vmatpush1.msra.mxu0 %v46
  %75 = vmatprep.subr.mxu0 0.0
  %76 = vmatpush1.msra.mxu0 %v47
  %77 = vmatprep.subr.mxu0 0.0
  %78 = vmatpush1.msra.mxu0 %v48
  %79 = vmatprep.subr.mxu0 0.0
  %80 = vmatpush1.msra.mxu0 %v49
  %81 = vmatprep.subr.mxu0 0.0
  %82 = vmatpush1.msra.mxu0 %v50
  %83 = vmatprep.subr.mxu0 0.0
  %84 = vmatpush1.msra.mxu0 %v51
  %85 = vmatprep.subr.mxu0 0.0
  %86 = vmatpush1.msra.mxu0 %v52
  %87 = vmatprep.subr.mxu0 0.0
  %88 = vmatpush1.msra.mxu0 %v53
  %89 = vmatprep.subr.mxu0 0.0
  %90 = vmatpush1.msra.mxu0 %v54
  %91 = vmatprep.subr.mxu0 0.0
  %92 = vmatpush1.msra.mxu0 %v55
  %93 = vmatprep.subr.mxu0 0.0
  %94 = vmatpush1.msra.mxu0 %v56
  %95 = vmatprep.subr.mxu0 0.0
  %96 = vmatpush1.msra.mxu0 %v57
  %97 = vmatprep.subr.mxu0 0.0
  %98 = vmatpush1.msra.mxu0 0.0
  %99 = vmatprep.subr.mxu0 0.0
  %100 = vmatpush1.msra.mxu0 0.0
  %101 = vmatprep.subr.mxu0 0.0
  %102 = vmatpush1.msra.mxu0 0.0
  %103 = vmatprep.subr.mxu0 0.0
  %104 = vmatpush1.msra.mxu0 0.0
  %105 = vmatprep.subr.mxu0 0.0
  %106 = vmatpush1.msra.mxu0 0.0
  %107 = vmatprep.subr.mxu0 0.0
  %108 = vmatpush1.msra.mxu0 0.0
  %109 = vmatprep.subr.mxu0 0.0
  %110 = vmatpush1.msra.mxu0 0.0
  %111 = vmatprep.subr.mxu0 0.0
  %112 = vmatpush1.msra.mxu0 0.0
  %113 = vmatprep.subr.mxu0 0.0
  %114 = vmatpush1.msra.mxu0 0.0
  %115 = vmatprep.subr.mxu0 0.0
  %116 = vmatpush1.msra.mxu0 0.0
  %117 = vmatprep.subr.mxu0 0.0
  %118 = vmatpush1.msra.mxu0 0.0
  %119 = vmatprep.subr.mxu0 0.0
  %120 = vmatpush1.msra.mxu0 0.0
  %121 = vmatprep.subr.mxu0 0.0
  %122 = vmatpush1.msra.mxu0 0.0
  %123 = vmatprep.subr.mxu0 0.0
  %124 = vmatpush1.msra.mxu0 0.0
  %125 = vmatprep.subr.mxu0 0.0
  %126 = vmatpush1.msra.mxu0 0.0
  %127 = vmatprep.subr.mxu0 0.0
  %128 = vmatpush1.msra.mxu0 0.0
  %129 = vmatprep.mubr.f32.mxu0 0.0
  %130 = vmatmul.mubr.f32.gmra.mrb[0].mxu0 %v41
  %v131 = vpop.f32.mrb[0].mxu0
  %v132 = vadd.f32 %v63, %v131
  %v133 = vpop.f32.mrb[0].mxu0
  %134 = vdwg.mxu0
  %v135 = vmax.f32 %v132, 0.0
  %v136 = vld [vmem:[%s4] sm:$0xff]
  %v137 = vld [vmem:[%s4 + $0x8] sm:$0xff]
  %v138 = vld [vmem:[%s4 + $0x10] sm:$0xff]
  %v139 = vld [vmem:[%s4 + $0x18] sm:$0xff]
  %v140 = vld [vmem:[%s5] sm:$0x1]
  %v142 = vlaneseq
  %v143 = vshrl.u32 %v142, 7
  %v144 = vsub.s32 0, %v143
  %v145 = vrot.slane %v140, %v144
  %vm147 = vcmask 261120
  %v149 = vsel %vm147, %v135, 0
  %151 = vmatprep.subr.mxu0 0.0
  %152 = vmatpush1.msra.mxu0 %v136
  %153 = vmatprep.subr.mxu0 0.0
  %154 = vmatpush1.msra.mxu0 %v137
  %155 = vmatprep.subr.mxu0 0.0
  %156 = vmatpush1.msra.mxu0 %v138
  %157 = vmatprep.subr.mxu0 0.0
  %158 = vmatpush1.msra.mxu0 %v139
  %159 = vmatprep.subr.mxu0 0.0
  %160 = vmatpush1.msra.mxu0 0.0
  %161 = vmatprep.subr.mxu0 0.0
  %162 = vmatpush1.msra.mxu0 0.0
  %163 = vmatprep.subr.mxu0 0.0
  %164 = vmatpush1.msra.mxu0 0.0
  %165 = vmatprep.subr.mxu0 0.0
  %166 = vmatpush1.msra.mxu0 0.0
  %167 = vmatprep.subr.mxu0 0.0
  %168 = vmatpush1.msra.mxu0 0.0
  %169 = vmatprep.subr.mxu0 0.0
  %170 = vmatpush1.msra.mxu0 0.0
  %171 = vmatprep.subr.mxu0 0.0
  %172 = vmatpush1.msra.mxu0 0.0
  %173 = vmatprep.subr.mxu0 0.0
  %174 = vmatpush1.msra.mxu0 0.0
  %175 = vmatprep.subr.mxu0 0.0
  %176 = vmatpush1.msra.mxu0 0.0
  %177 = vmatprep.subr.mxu0 0.0
  %178 = vmatpush1.msra.mxu0 0.0
  %179 = vmatprep.subr.mxu0 0.0
  %180 = vmatpush1.msra.mxu0 0.0
  %181 = vmatprep.subr.mxu0 0.0
  %182 = vmatpush1.msra.mxu0 0.0
  %183 = vmatprep.subr.mxu0 0.0
  %184 = vmatpush1.msra.mxu0 0.0
  %185 = vmatprep.subr.mxu0 0.0
  %186 = vmatpush1.msra.mxu0 0.0
  %187 = vmatprep.subr.mxu0 0.0
  %188 = vmatpush1.msra.mxu0 0.0
  %189 = vmatprep.subr.mxu0 0.0
  %190 = vmatpush1.msra.mxu0 0.0
  %191 = vmatprep.subr.mxu0 0.0
  %192 = vmatpush1.msra.mxu0 0.0
  %193 = vmatprep.subr.mxu0 0.0
  %194 = vmatpush1.msra.mxu0 0.0
  %195 = vmatprep.subr.mxu0 0.0
  %196 = vmatpush1.msra.mxu0 0.0
  %197 = vmatprep.subr.mxu0 0.0
  %198 = vmatpush1.msra.mxu0 0.0
  %199 = vmatprep.subr.mxu0 0.0
  %200 = vmatpush1.msra.mxu0 0.0
  %201 = vmatprep.subr.mxu0 0.0
  %202 = vmatpush1.msra.mxu0 0.0
  %203 = vmatprep.subr.mxu0 0.0
  %204 = vmatpush1.msra.mxu0 0.0
  %205 = vmatprep.subr.mxu0 0.0
  %206 = vmatpush1.msra.mxu0 0.0
  %207 = vmatprep.subr.mxu0 0.0
  %208 = vmatpush1.msra.mxu0 0.0
  %209 = vmatprep.subr.mxu0 0.0
  %210 = vmatpush1.msra.mxu0 0.0
  %211 = vmatprep.subr.mxu0 0.0
  %212 = vmatpush1.msra.mxu0 0.0
  %213 = vmatprep.subr.mxu0 0.0
  %214 = vmatpush1.msra.mxu0 0.0
  %215 = vmatprep.mubr.f32.mxu0 0.0
  %216 = vmatmul.mubr.f32.gmra.mrb[0].mxu0 %v149
  %v217 = vpop.f32.mrb[0].mxu0
  %v218 = vadd.f32 %v145, %v217
  %v219 = vpop.f32.mrb[0].mxu0
  %220 = vdwg.mxu0
  %v221 = vmax.f32 %v218, 0.0
  %v222 = vld [vmem:[%s6] sm:$0xff]
  %v223 = vld [vmem:[%s6 + $0x8] sm:$0xff]
  %v224 = vld [vmem:[%s6 + $0x10] sm:$0xff]
  %v225 = vld [vmem:[%s6 + $0x18] sm:$0xff]
  %v226 = vld [vmem:[%s7] sm:$0x1]
  %v228 = vlaneseq
  %v229 = vshrl.u32 %v228, 7
  %v230 = vsub.s32 0, %v229
  %v231 = vrot.slane %v226, %v230
  %v234 = vsel %vm147, %v221, 0
  %236 = vmatprep.subr.mxu0 0.0
  %237 = vmatpush1.msra.mxu0 %v222
  %238 = vmatprep.subr.mxu0 0.0
  %239 = vmatpush1.msra.mxu0 %v223
  %240 = vmatprep.subr.mxu0 0.0
  %241 = vmatpush1.msra.mxu0 %v224
  %242 = vmatprep.subr.mxu0 0.0
  %243 = vmatpush1.msra.mxu0 %v225
  %244 = vmatprep.subr.mxu0 0.0
  %245 = vmatpush1.msra.mxu0 0.0
  %246 = vmatprep.subr.mxu0 0.0
  %247 = vmatpush1.msra.mxu0 0.0
  %248 = vmatprep.subr.mxu0 0.0
  %249 = vmatpush1.msra.mxu0 0.0
  %250 = vmatprep.subr.mxu0 0.0
  %251 = vmatpush1.msra.mxu0 0.0
  %252 = vmatprep.subr.mxu0 0.0
  %253 = vmatpush1.msra.mxu0 0.0
  %254 = vmatprep.subr.mxu0 0.0
  %255 = vmatpush1.msra.mxu0 0.0
  %256 = vmatprep.subr.mxu0 0.0
  %257 = vmatpush1.msra.mxu0 0.0
  %258 = vmatprep.subr.mxu0 0.0
  %259 = vmatpush1.msra.mxu0 0.0
  %260 = vmatprep.subr.mxu0 0.0
  %261 = vmatpush1.msra.mxu0 0.0
  %262 = vmatprep.subr.mxu0 0.0
  %263 = vmatpush1.msra.mxu0 0.0
  %264 = vmatprep.subr.mxu0 0.0
  %265 = vmatpush1.msra.mxu0 0.0
  %266 = vmatprep.subr.mxu0 0.0
  %267 = vmatpush1.msra.mxu0 0.0
  %268 = vmatprep.subr.mxu0 0.0
  %269 = vmatpush1.msra.mxu0 0.0
  %270 = vmatprep.subr.mxu0 0.0
  %271 = vmatpush1.msra.mxu0 0.0
  %272 = vmatprep.subr.mxu0 0.0
  %273 = vmatpush1.msra.mxu0 0.0
  %274 = vmatprep.subr.mxu0 0.0
  %275 = vmatpush1.msra.mxu0 0.0
  %276 = vmatprep.subr.mxu0 0.0
  %277 = vmatpush1.msra.mxu0 0.0
  %278 = vmatprep.subr.mxu0 0.0
  %279 = vmatpush1.msra.mxu0 0.0
  %280 = vmatprep.subr.mxu0 0.0
  %281 = vmatpush1.msra.mxu0 0.0
  %282 = vmatprep.subr.mxu0 0.0
  %283 = vmatpush1.msra.mxu0 0.0
  %284 = vmatprep.subr.mxu0 0.0
  %285 = vmatpush1.msra.mxu0 0.0
  %286 = vmatprep.subr.mxu0 0.0
  %287 = vmatpush1.msra.mxu0 0.0
  %288 = vmatprep.subr.mxu0 0.0
  %289 = vmatpush1.msra.mxu0 0.0
  %290 = vmatprep.subr.mxu0 0.0
  %291 = vmatpush1.msra.mxu0 0.0
  %292 = vmatprep.subr.mxu0 0.0
  %293 = vmatpush1.msra.mxu0 0.0
  %294 = vmatprep.subr.mxu0 0.0
  %295 = vmatpush1.msra.mxu0 0.0
  %296 = vmatprep.subr.mxu0 0.0
  %297 = vmatpush1.msra.mxu0 0.0
  %298 = vmatprep.subr.mxu0 0.0
  %299 = vmatpush1.msra.mxu0 0.0
  %300 = vmatprep.mubr.f32.mxu0 0.0
  %301 = vmatmul.mubr.f32.gmra.mrb[0].mxu0 %v234
  %v302 = vpop.f32.mrb[0].mxu0
  %v303 = vadd.f32 %v231, %v302
  %v304 = vpop.f32.mrb[0].mxu0
  %305 = vdwg.mxu0
  %306 = vst [vmem:[%s8] sm:$0xff] %v303
  // Predicated region
  $region34: #{critic_forward.1} parent=0 // pred_check
    _
  $region35: #{critic_forward.1} parent=0 // pred_check_branch
    %308 = sbr.rel (0) target = $region37
  $region36: #{critic_forward.1} parent=0 // pred_region
    _
  $region37: #{critic_forward.1} parent=0 // pred_fallthru
    _
  // Predicated region
  $region38: #{critic_forward.1} parent=0 // pred_check
    _
  $region39: #{critic_forward.1} parent=0 // pred_check_branch
    %310 = sbr.rel (0) target = $region41
  $region40: #{critic_forward.1} parent=0 // pred_region
    _
  $region41: #{critic_forward.1} parent=0 // pred_fallthru
    _

</llo_original>
